<compile_context>
chip_gen: v7x
topology: tpu7x:2x2x1
jax: 0.10.0
libtpu: 0.0.40
codegen_flags: <defaults>
</compile_context>

<pallas_src>
import jax
import jax.numpy as jnp
from jax import lax
from jax.experimental import pallas as pl
from jax.experimental.pallas import tpu as pltpu


def make_sir_kernel(T: int):
    """Build a kernel that advances T simulation steps per grid iteration."""

    def sir_kernel(x_ref, a_ref, beta_ref, gamma_ref, out_ref, state_ref):
        c = pl.program_id(0)

        # First chunk: seed the carried state with the initial condition.
        @pl.when(c == 0)
        def _init():
            state_ref[...] = x_ref[...]

        beta = beta_ref[...]          # (1, Np)
        gamma = gamma_ref[...]        # (1, Np)
        a = a_ref[...]                # (Np, Np)  A = H^T H (symmetric)

        s0 = state_ref[0:1, :]        # (1, Np)
        i0 = state_ref[1:2, :]
        r0 = state_ref[2:3, :]

        def body(t, carry):
            s, inf, r = carry
            # coupling = I_prev @ A  (== H^T (H I_prev) for symmetric A), lane-dense (1, Np)
            coupling = jnp.dot(inf, a, preferred_element_type=jnp.float32)

            new_cases = beta * (s * coupling)
            new_rec = gamma * inf

            s_n = jnp.maximum(s - new_cases, 0.0)
            i_n = jnp.maximum(inf + new_cases - new_rec, 0.0)
            r_n = jnp.maximum(r + new_rec, 0.0)

            inv_total = pl.reciprocal(s_n + i_n + r_n, approx=False)
            s_n = s_n * inv_total
            i_n = i_n * inv_total
            r_n = r_n * inv_total

            # Global step 0 emits the initial state unchanged.
            is_first = (c * T + t) == 0
            s_n = jnp.where(is_first, s, s_n)
            i_n = jnp.where(is_first, inf, i_n)
            r_n = jnp.where(is_first, r, r_n)

            out_ref[pl.ds(t, 1), 0:1, :] = s_n[None]
            out_ref[pl.ds(t, 1), 1:2, :] = i_n[None]
            out_ref[pl.ds(t, 1), 2:3, :] = r_n[None]
            return (s_n, i_n, r_n)

        s_f, i_f, r_f = lax.fori_loop(0, T, body, (s0, i0, r0), unroll=True)

        # Persist state for the next chunk.
        state_ref[0:1, :] = s_f
        state_ref[1:2, :] = i_f
        state_ref[2:3, :] = r_f

    return sir_kernel


def hypernet_sir_pallas(x, H, beta, gamma, steps, chunk=16):
    """x: (N, 3), H: (E, N), beta/gamma: (N,). Returns (steps, N, 3) float32."""
    N = x.shape[0]
    T = int(min(steps, chunk))
    num_chunks = -(-steps // T)            # ceil
    steps_pad = num_chunks * T
    N_pad = ((N + 127) // 128) * 128       # lane-dense last dim

    # States-major, node-on-lanes layout; padded nodes get S=1 (safe normalize).
    x_t = jnp.zeros((3, N_pad), jnp.float32).at[:, :N].set(
        jnp.transpose(x.astype(jnp.float32)))
    x_t = x_t.at[0, N:].set(1.0)

    # Precompute the coupling operator A = H^T H once (zero-padded).
    Hf = H.astype(jnp.float32)
    A = jnp.dot(Hf.T, Hf)                                   # (N, N)
    A_pad = jnp.zeros((N_pad, N_pad), jnp.float32).at[:N, :N].set(A)

    beta_p = jnp.zeros((1, N_pad), jnp.float32).at[0, :N].set(beta.astype(jnp.float32))
    gamma_p = jnp.zeros((1, N_pad), jnp.float32).at[0, :N].set(gamma.astype(jnp.float32))

    kernel = make_sir_kernel(T)

    out = pl.pallas_call(
        kernel,
        out_shape=jax.ShapeDtypeStruct((steps_pad, 3, N_pad), jnp.float32),
        grid_spec=pltpu.PrefetchScalarGridSpec(
            num_scalar_prefetch=0,
            grid=(num_chunks,),
            in_specs=[
                pl.BlockSpec((3, N_pad), lambda c: (0, 0)),        # x  (states-major)
                pl.BlockSpec((N_pad, N_pad), lambda c: (0, 0)),    # A = H^T H
                pl.BlockSpec((1, N_pad), lambda c: (0, 0)),        # beta
                pl.BlockSpec((1, N_pad), lambda c: (0, 0)),        # gamma
            ],
            out_specs=pl.BlockSpec((T, 3, N_pad), lambda c: (c, 0, 0)),
            scratch_shapes=[pltpu.VMEM((3, N_pad), jnp.float32)],
        ),
        compiler_params=pltpu.CompilerParams(
            dimension_semantics=("arbitrary",)),                   # sequential time dep
    )(x_t, A_pad, beta_p, gamma_p)

    return jnp.transpose(out[:steps, :, :N], (0, 2, 1))            # (steps, N, 3)


def hypernet_sir_ref(x, H, beta, gamma, steps):
    """Pure-JAX reference mirroring the PyTorch loop."""
    H = H.astype(jnp.float32)
    prev = x.astype(jnp.float32)
    outs = [prev]
    for _ in range(1, steps):
        s, inf, r = prev[:, 0], prev[:, 1], prev[:, 2]
        coupling = H.T @ (H @ inf)
        new_cases = beta * (s * coupling)
        new_rec = gamma * inf
        st = jnp.stack([s - new_cases, inf + new_cases - new_rec, r + new_rec], axis=1)
        st = jnp.maximum(st, 0.0)
        st = st / jnp.sum(st, axis=1, keepdims=True)
        outs.append(st)
        prev = st
    return jnp.stack(outs, axis=0)


if __name__ == "__main__":
    num_nodes = 16
    num_hyperedges = 8
    steps = 8

    key = jax.random.PRNGKey(0)
    kx, kh = jax.random.split(key)

    # Per-node state probabilities (rows sum to 1), deterministic.
    x_raw = jax.random.uniform(kx, (num_nodes, 3), dtype=jnp.float32) + 0.1
    x = x_raw / jnp.sum(x_raw, axis=1, keepdims=True)

    # Random 0/1 hypergraph incidence matrix.
    H = jax.random.bernoulli(kh, 0.4, (num_hyperedges, num_nodes)).astype(jnp.float32)

    # Parameters as initialized in HyperNetSIR.__init__ (deterministic fill).
    beta = jnp.full((num_nodes,), 0.01, dtype=jnp.float32)
    gamma = jnp.full((num_nodes,), 0.038, dtype=jnp.float32)

    out = hypernet_sir_pallas(x, H, beta, gamma, steps)
    out = jax.block_until_ready(out)

    ref = hypernet_sir_ref(x, H, beta, gamma, steps)
    assert out.shape == (steps, num_nodes, 3)
    assert jnp.allclose(out, ref, atol=1e-5, rtol=1e-5), "mismatch vs reference"

    print("KERNEL_OK")
</pallas_src>

<mosaic_0001>
module attributes {stable_mosaic.version = 11 : i64} {
  func.func @sir_kernel(%arg0: i32, %arg1: memref<3x128xf32, #tpu.memory_space<vmem>>, %arg2: memref<128x128xf32, #tpu.memory_space<vmem>>, %arg3: memref<1x128xf32, #tpu.memory_space<vmem>>, %arg4: memref<1x128xf32, #tpu.memory_space<vmem>>, %arg5: memref<8x3x128xf32, #tpu.memory_space<vmem>>, %arg6: memref<3x128xf32, #tpu.memory_space<vmem>>) attributes {dimension_semantics = [#tpu.dimension_semantics<arbitrary>], iteration_bounds = array<i64: 1>, scalar_prefetch = 0 : i64, scratch_operands = 1 : i64, tpu.core_type = #tpu.core_type<tc>, window_params = [{pipeline_mode = #tpu.pipeline_mode<synchronous>, transform_indices = @transform_0, window_bounds = array<i64: 3, 128>}, {pipeline_mode = #tpu.pipeline_mode<synchronous>, transform_indices = @transform_1, window_bounds = array<i64: 128, 128>}, {pipeline_mode = #tpu.pipeline_mode<synchronous>, transform_indices = @transform_2, window_bounds = array<i64: 1, 128>}, {pipeline_mode = #tpu.pipeline_mode<synchronous>, transform_indices = @transform_3, window_bounds = array<i64: 1, 128>}, {transform_indices = @transform_4, window_bounds = array<i64: 8, 3, 128>}]} {
    %c0_i32 = arith.constant 0 : i32
    %0 = arith.cmpi eq, %arg0, %c0_i32 : i32
    %1 = arith.extui %0 : i1 to i32
    %c0_i32_0 = arith.constant 0 : i32
    %2 = arith.cmpi ne, %1, %c0_i32_0 : i32
    scf.if %2 {
      %c0_112 = arith.constant 0 : index
      %c0_113 = arith.constant 0 : index
      %292 = vector.load %arg1[%c0_112, %c0_113] : memref<3x128xf32, #tpu.memory_space<vmem>>, vector<3x128xf32>
      %c0_114 = arith.constant 0 : index
      %c0_115 = arith.constant 0 : index
      %293 = vector.load %arg6[%c0_114, %c0_115] : memref<3x128xf32, #tpu.memory_space<vmem>>, vector<3x128xf32>
      tpu.vector_store %arg6[%c0_114, %c0_115], %292 {strides = array<i32>} : memref<3x128xf32, #tpu.memory_space<vmem>>, vector<3x128xf32>,
    } else {
    }
    %c0 = arith.constant 0 : index
    %c0_1 = arith.constant 0 : index
    %3 = vector.load %arg3[%c0, %c0_1] : memref<1x128xf32, #tpu.memory_space<vmem>>, vector<1x128xf32>
    %c0_2 = arith.constant 0 : index
    %c0_3 = arith.constant 0 : index
    %4 = vector.load %arg4[%c0_2, %c0_3] : memref<1x128xf32, #tpu.memory_space<vmem>>, vector<1x128xf32>
    %c0_4 = arith.constant 0 : index
    %c0_5 = arith.constant 0 : index
    %5 = vector.load %arg2[%c0_4, %c0_5] : memref<128x128xf32, #tpu.memory_space<vmem>>, vector<128x128xf32>
    %c0_6 = arith.constant 0 : index
    %c0_7 = arith.constant 0 : index
    %6 = vector.load %arg6[%c0_6, %c0_7] : memref<3x128xf32, #tpu.memory_space<vmem>>, vector<1x128xf32>
    %c1 = arith.constant 1 : index
    %c0_8 = arith.constant 0 : index
    %7 = vector.load %arg6[%c1, %c0_8] : memref<3x128xf32, #tpu.memory_space<vmem>>, vector<1x128xf32>
    %c2 = arith.constant 2 : index
    %c0_9 = arith.constant 0 : index
    %8 = vector.load %arg6[%c2, %c0_9] : memref<3x128xf32, #tpu.memory_space<vmem>>, vector<1x128xf32>
    %c0_i32_10 = arith.constant 0 : i32
    %cst = arith.constant dense<0.000000e+00> : vector<1x128xf32>
    %9 = tpu.matmul %7, %5, %cst {dimension_numbers = #tpu.dot_dimension_numbers<[1], [0], [0], [1], [0, 0, 1, 1], [], []>} : vector<1x128xf32>, vector<128x128xf32>, vector<1x128xf32> -> vector<1x128xf32>
    %10 = arith.mulf %6, %9 : vector<1x128xf32>
    %11 = arith.mulf %3, %10 : vector<1x128xf32>
    %12 = arith.mulf %4, %7 : vector<1x128xf32>
    %13 = arith.subf %6, %11 : vector<1x128xf32>
    %cst_11 = arith.constant 0.000000e+00 : f32
    %14 = vector.broadcast %cst_11 : f32 to vector<1x128xf32>
    %15 = arith.maximumf %13, %14 : vector<1x128xf32>
    %16 = arith.addf %7, %11 : vector<1x128xf32>
    %17 = arith.subf %16, %12 : vector<1x128xf32>
    %cst_12 = arith.constant 0.000000e+00 : f32
    %18 = vector.broadcast %cst_12 : f32 to vector<1x128xf32>
    %19 = arith.maximumf %17, %18 : vector<1x128xf32>
    %20 = arith.addf %8, %12 : vector<1x128xf32>
    %cst_13 = arith.constant 0.000000e+00 : f32
    %21 = vector.broadcast %cst_13 : f32 to vector<1x128xf32>
    %22 = arith.maximumf %20, %21 : vector<1x128xf32>
    %23 = arith.addf %15, %19 : vector<1x128xf32>
    %24 = arith.addf %23, %22 : vector<1x128xf32>
    %25 = tpu.reciprocal %24 : vector<1x128xf32> -> vector<1x128xf32>
    %26 = arith.mulf %15, %25 : vector<1x128xf32>
    %27 = arith.mulf %19, %25 : vector<1x128xf32>
    %28 = arith.mulf %22, %25 : vector<1x128xf32>
    %c8_i32 = arith.constant 8 : i32
    %29 = arith.muli %arg0, %c8_i32 : i32
    %30 = arith.addi %29, %c0_i32_10 : i32
    %c0_i32_14 = arith.constant 0 : i32
    %31 = arith.cmpi eq, %30, %c0_i32_14 : i32
    %32 = arith.select %31, %6, %26 : vector<1x128xf32>
    %33 = arith.select %31, %7, %27 : vector<1x128xf32>
    %34 = arith.select %31, %8, %28 : vector<1x128xf32>
    %35 = vector.shape_cast %32 : vector<1x128xf32> to vector<1x1x128xf32>
    %36 = arith.index_cast %c0_i32_10 : i32 to index
    %c0_15 = arith.constant 0 : index
    %c0_16 = arith.constant 0 : index
    %37 = vector.load %arg5[%36, %c0_15, %c0_16] : memref<8x3x128xf32, #tpu.memory_space<vmem>>, vector<1x1x128xf32>
    tpu.vector_store %arg5[%36, %c0_15, %c0_16], %35 {strides = array<i32>} : memref<8x3x128xf32, #tpu.memory_space<vmem>>, vector<1x1x128xf32>,
    %38 = vector.shape_cast %33 : vector<1x128xf32> to vector<1x1x128xf32>
    %39 = arith.index_cast %c0_i32_10 : i32 to index
    %c1_17 = arith.constant 1 : index
    %c0_18 = arith.constant 0 : index
    %40 = vector.load %arg5[%39, %c1_17, %c0_18] : memref<8x3x128xf32, #tpu.memory_space<vmem>>, vector<1x1x128xf32>
    tpu.vector_store %arg5[%39, %c1_17, %c0_18], %38 {strides = array<i32>} : memref<8x3x128xf32, #tpu.memory_space<vmem>>, vector<1x1x128xf32>,
    %41 = vector.shape_cast %34 : vector<1x128xf32> to vector<1x1x128xf32>
    %42 = arith.index_cast %c0_i32_10 : i32 to index
    %c2_19 = arith.constant 2 : index
    %c0_20 = arith.constant 0 : index
    %43 = vector.load %arg5[%42, %c2_19, %c0_20] : memref<8x3x128xf32, #tpu.memory_space<vmem>>, vector<1x1x128xf32>
    tpu.vector_store %arg5[%42, %c2_19, %c0_20], %41 {strides = array<i32>} : memref<8x3x128xf32, #tpu.memory_space<vmem>>, vector<1x1x128xf32>,
    %c1_i32 = arith.constant 1 : i32
    %cst_21 = arith.constant dense<0.000000e+00> : vector<1x128xf32>
    %44 = tpu.matmul %33, %5, %cst_21 {dimension_numbers = #tpu.dot_dimension_numbers<[1], [0], [0], [1], [0, 0, 1, 1], [], []>} : vector<1x128xf32>, vector<128x128xf32>, vector<1x128xf32> -> vector<1x128xf32>
    %45 = arith.mulf %32, %44 : vector<1x128xf32>
    %46 = arith.mulf %3, %45 : vector<1x128xf32>
    %47 = arith.mulf %4, %33 : vector<1x128xf32>
    %48 = arith.subf %32, %46 : vector<1x128xf32>
    %cst_22 = arith.constant 0.000000e+00 : f32
    %49 = vector.broadcast %cst_22 : f32 to vector<1x128xf32>
    %50 = arith.maximumf %48, %49 : vector<1x128xf32>
    %51 = arith.addf %33, %46 : vector<1x128xf32>
    %52 = arith.subf %51, %47 : vector<1x128xf32>
    %cst_23 = arith.constant 0.000000e+00 : f32
    %53 = vector.broadcast %cst_23 : f32 to vector<1x128xf32>
    %54 = arith.maximumf %52, %53 : vector<1x128xf32>
    %55 = arith.addf %34, %47 : vector<1x128xf32>
    %cst_24 = arith.constant 0.000000e+00 : f32
    %56 = vector.broadcast %cst_24 : f32 to vector<1x128xf32>
    %57 = arith.maximumf %55, %56 : vector<1x128xf32>
    %58 = arith.addf %50, %54 : vector<1x128xf32>
    %59 = arith.addf %58, %57 : vector<1x128xf32>
    %60 = tpu.reciprocal %59 : vector<1x128xf32> -> vector<1x128xf32>
    %61 = arith.mulf %50, %60 : vector<1x128xf32>
    %62 = arith.mulf %54, %60 : vector<1x128xf32>
    %63 = arith.mulf %57, %60 : vector<1x128xf32>
    %c8_i32_25 = arith.constant 8 : i32
    %64 = arith.muli %arg0, %c8_i32_25 : i32
    %65 = arith.addi %64, %c1_i32 : i32
    %c0_i32_26 = arith.constant 0 : i32
    %66 = arith.cmpi eq, %65, %c0_i32_26 : i32
    %67 = arith.select %66, %32, %61 : vector<1x128xf32>
    %68 = arith.select %66, %33, %62 : vector<1x128xf32>
    %69 = arith.select %66, %34, %63 : vector<1x128xf32>
    %70 = vector.shape_cast %67 : vector<1x128xf32> to vector<1x1x128xf32>
    %71 = arith.index_cast %c1_i32 : i32 to index
    %c0_27 = arith.constant 0 : index
    %c0_28 = arith.constant 0 : index
    %72 = vector.load %arg5[%71, %c0_27, %c0_28] : memref<8x3x128xf32, #tpu.memory_space<vmem>>, vector<1x1x128xf32>
    tpu.vector_store %arg5[%71, %c0_27, %c0_28], %70 {strides = array<i32>} : memref<8x3x128xf32, #tpu.memory_space<vmem>>, vector<1x1x128xf32>,
    %73 = vector.shape_cast %68 : vector<1x128xf32> to vector<1x1x128xf32>
    %74 = arith.index_cast %c1_i32 : i32 to index
    %c1_29 = arith.constant 1 : index
    %c0_30 = arith.constant 0 : index
    %75 = vector.load %arg5[%74, %c1_29, %c0_30] : memref<8x3x128xf32, #tpu.memory_space<vmem>>, vector<1x1x128xf32>
    tpu.vector_store %arg5[%74, %c1_29, %c0_30], %73 {strides = array<i32>} : memref<8x3x128xf32, #tpu.memory_space<vmem>>, vector<1x1x128xf32>,
    %76 = vector.shape_cast %69 : vector<1x128xf32> to vector<1x1x128xf32>
    %77 = arith.index_cast %c1_i32 : i32 to index
    %c2_31 = arith.constant 2 : index
    %c0_32 = arith.constant 0 : index
    %78 = vector.load %arg5[%77, %c2_31, %c0_32] : memref<8x3x128xf32, #tpu.memory_space<vmem>>, vector<1x1x128xf32>
    tpu.vector_store %arg5[%77, %c2_31, %c0_32], %76 {strides = array<i32>} : memref<8x3x128xf32, #tpu.memory_space<vmem>>, vector<1x1x128xf32>,
    %c2_i32 = arith.constant 2 : i32
    %cst_33 = arith.constant dense<0.000000e+00> : vector<1x128xf32>
    %79 = tpu.matmul %68, %5, %cst_33 {dimension_numbers = #tpu.dot_dimension_numbers<[1], [0], [0], [1], [0, 0, 1, 1], [], []>} : vector<1x128xf32>, vector<128x128xf32>, vector<1x128xf32> -> vector<1x128xf32>
    %80 = arith.mulf %67, %79 : vector<1x128xf32>
    %81 = arith.mulf %3, %80 : vector<1x128xf32>
    %82 = arith.mulf %4, %68 : vector<1x128xf32>
    %83 = arith.subf %67, %81 : vector<1x128xf32>
    %cst_34 = arith.constant 0.000000e+00 : f32
    %84 = vector.broadcast %cst_34 : f32 to vector<1x128xf32>
    %85 = arith.maximumf %83, %84 : vector<1x128xf32>
    %86 = arith.addf %68, %81 : vector<1x128xf32>
    %87 = arith.subf %86, %82 : vector<1x128xf32>
    %cst_35 = arith.constant 0.000000e+00 : f32
    %88 = vector.broadcast %cst_35 : f32 to vector<1x128xf32>
    %89 = arith.maximumf %87, %88 : vector<1x128xf32>
    %90 = arith.addf %69, %82 : vector<1x128xf32>
    %cst_36 = arith.constant 0.000000e+00 : f32
    %91 = vector.broadcast %cst_36 : f32 to vector<1x128xf32>
    %92 = arith.maximumf %90, %91 : vector<1x128xf32>
    %93 = arith.addf %85, %89 : vector<1x128xf32>
    %94 = arith.addf %93, %92 : vector<1x128xf32>
    %95 = tpu.reciprocal %94 : vector<1x128xf32> -> vector<1x128xf32>
    %96 = arith.mulf %85, %95 : vector<1x128xf32>
    %97 = arith.mulf %89, %95 : vector<1x128xf32>
    %98 = arith.mulf %92, %95 : vector<1x128xf32>
    %c8_i32_37 = arith.constant 8 : i32
    %99 = arith.muli %arg0, %c8_i32_37 : i32
    %100 = arith.addi %99, %c2_i32 : i32
    %c0_i32_38 = arith.constant 0 : i32
    %101 = arith.cmpi eq, %100, %c0_i32_38 : i32
    %102 = arith.select %101, %67, %96 : vector<1x128xf32>
    %103 = arith.select %101, %68, %97 : vector<1x128xf32>
    %104 = arith.select %101, %69, %98 : vector<1x128xf32>
    %105 = vector.shape_cast %102 : vector<1x128xf32> to vector<1x1x128xf32>
    %106 = arith.index_cast %c2_i32 : i32 to index
    %c0_39 = arith.constant 0 : index
    %c0_40 = arith.constant 0 : index
    %107 = vector.load %arg5[%106, %c0_39, %c0_40] : memref<8x3x128xf32, #tpu.memory_space<vmem>>, vector<1x1x128xf32>
    tpu.vector_store %arg5[%106, %c0_39, %c0_40], %105 {strides = array<i32>} : memref<8x3x128xf32, #tpu.memory_space<vmem>>, vector<1x1x128xf32>,
    %108 = vector.shape_cast %103 : vector<1x128xf32> to vector<1x1x128xf32>
    %109 = arith.index_cast %c2_i32 : i32 to index
    %c1_41 = arith.constant 1 : index
    %c0_42 = arith.constant 0 : index
    %110 = vector.load %arg5[%109, %c1_41, %c0_42] : memref<8x3x128xf32, #tpu.memory_space<vmem>>, vector<1x1x128xf32>
    tpu.vector_store %arg5[%109, %c1_41, %c0_42], %108 {strides = array<i32>} : memref<8x3x128xf32, #tpu.memory_space<vmem>>, vector<1x1x128xf32>,
    %111 = vector.shape_cast %104 : vector<1x128xf32> to vector<1x1x128xf32>
    %112 = arith.index_cast %c2_i32 : i32 to index
    %c2_43 = arith.constant 2 : index
    %c0_44 = arith.constant 0 : index
    %113 = vector.load %arg5[%112, %c2_43, %c0_44] : memref<8x3x128xf32, #tpu.memory_space<vmem>>, vector<1x1x128xf32>
    tpu.vector_store %arg5[%112, %c2_43, %c0_44], %111 {strides = array<i32>} : memref<8x3x128xf32, #tpu.memory_space<vmem>>, vector<1x1x128xf32>,
    %c3_i32 = arith.constant 3 : i32
    %cst_45 = arith.constant dense<0.000000e+00> : vector<1x128xf32>
    %114 = tpu.matmul %103, %5, %cst_45 {dimension_numbers = #tpu.dot_dimension_numbers<[1], [0], [0], [1], [0, 0, 1, 1], [], []>} : vector<1x128xf32>, vector<128x128xf32>, vector<1x128xf32> -> vector<1x128xf32>
    %115 = arith.mulf %102, %114 : vector<1x128xf32>
    %116 = arith.mulf %3, %115 : vector<1x128xf32>
    %117 = arith.mulf %4, %103 : vector<1x128xf32>
    %118 = arith.subf %102, %116 : vector<1x128xf32>
    %cst_46 = arith.constant 0.000000e+00 : f32
    %119 = vector.broadcast %cst_46 : f32 to vector<1x128xf32>
    %120 = arith.maximumf %118, %119 : vector<1x128xf32>
    %121 = arith.addf %103, %116 : vector<1x128xf32>
    %122 = arith.subf %121, %117 : vector<1x128xf32>
    %cst_47 = arith.constant 0.000000e+00 : f32
    %123 = vector.broadcast %cst_47 : f32 to vector<1x128xf32>
    %124 = arith.maximumf %122, %123 : vector<1x128xf32>
    %125 = arith.addf %104, %117 : vector<1x128xf32>
    %cst_48 = arith.constant 0.000000e+00 : f32
    %126 = vector.broadcast %cst_48 : f32 to vector<1x128xf32>
    %127 = arith.maximumf %125, %126 : vector<1x128xf32>
    %128 = arith.addf %120, %124 : vector<1x128xf32>
    %129 = arith.addf %128, %127 : vector<1x128xf32>
    %130 = tpu.reciprocal %129 : vector<1x128xf32> -> vector<1x128xf32>
    %131 = arith.mulf %120, %130 : vector<1x128xf32>
    %132 = arith.mulf %124, %130 : vector<1x128xf32>
    %133 = arith.mulf %127, %130 : vector<1x128xf32>
    %c8_i32_49 = arith.constant 8 : i32
    %134 = arith.muli %arg0, %c8_i32_49 : i32
    %135 = arith.addi %134, %c3_i32 : i32
    %c0_i32_50 = arith.constant 0 : i32
    %136 = arith.cmpi eq, %135, %c0_i32_50 : i32
    %137 = arith.select %136, %102, %131 : vector<1x128xf32>
    %138 = arith.select %136, %103, %132 : vector<1x128xf32>
    %139 = arith.select %136, %104, %133 : vector<1x128xf32>
    %140 = vector.shape_cast %137 : vector<1x128xf32> to vector<1x1x128xf32>
    %141 = arith.index_cast %c3_i32 : i32 to index
    %c0_51 = arith.constant 0 : index
    %c0_52 = arith.constant 0 : index
    %142 = vector.load %arg5[%141, %c0_51, %c0_52] : memref<8x3x128xf32, #tpu.memory_space<vmem>>, vector<1x1x128xf32>
    tpu.vector_store %arg5[%141, %c0_51, %c0_52], %140 {strides = array<i32>} : memref<8x3x128xf32, #tpu.memory_space<vmem>>, vector<1x1x128xf32>,
    %143 = vector.shape_cast %138 : vector<1x128xf32> to vector<1x1x128xf32>
    %144 = arith.index_cast %c3_i32 : i32 to index
    %c1_53 = arith.constant 1 : index
    %c0_54 = arith.constant 0 : index
    %145 = vector.load %arg5[%144, %c1_53, %c0_54] : memref<8x3x128xf32, #tpu.memory_space<vmem>>, vector<1x1x128xf32>
    tpu.vector_store %arg5[%144, %c1_53, %c0_54], %143 {strides = array<i32>} : memref<8x3x128xf32, #tpu.memory_space<vmem>>, vector<1x1x128xf32>,
    %146 = vector.shape_cast %139 : vector<1x128xf32> to vector<1x1x128xf32>
    %147 = arith.index_cast %c3_i32 : i32 to index
    %c2_55 = arith.constant 2 : index
    %c0_56 = arith.constant 0 : index
    %148 = vector.load %arg5[%147, %c2_55, %c0_56] : memref<8x3x128xf32, #tpu.memory_space<vmem>>, vector<1x1x128xf32>
    tpu.vector_store %arg5[%147, %c2_55, %c0_56], %146 {strides = array<i32>} : memref<8x3x128xf32, #tpu.memory_space<vmem>>, vector<1x1x128xf32>,
    %c4_i32 = arith.constant 4 : i32
    %cst_57 = arith.constant dense<0.000000e+00> : vector<1x128xf32>
    %149 = tpu.matmul %138, %5, %cst_57 {dimension_numbers = #tpu.dot_dimension_numbers<[1], [0], [0], [1], [0, 0, 1, 1], [], []>} : vector<1x128xf32>, vector<128x128xf32>, vector<1x128xf32> -> vector<1x128xf32>
    %150 = arith.mulf %137, %149 : vector<1x128xf32>
    %151 = arith.mulf %3, %150 : vector<1x128xf32>
    %152 = arith.mulf %4, %138 : vector<1x128xf32>
    %153 = arith.subf %137, %151 : vector<1x128xf32>
    %cst_58 = arith.constant 0.000000e+00 : f32
    %154 = vector.broadcast %cst_58 : f32 to vector<1x128xf32>
    %155 = arith.maximumf %153, %154 : vector<1x128xf32>
    %156 = arith.addf %138, %151 : vector<1x128xf32>
    %157 = arith.subf %156, %152 : vector<1x128xf32>
    %cst_59 = arith.constant 0.000000e+00 : f32
    %158 = vector.broadcast %cst_59 : f32 to vector<1x128xf32>
    %159 = arith.maximumf %157, %158 : vector<1x128xf32>
    %160 = arith.addf %139, %152 : vector<1x128xf32>
    %cst_60 = arith.constant 0.000000e+00 : f32
    %161 = vector.broadcast %cst_60 : f32 to vector<1x128xf32>
    %162 = arith.maximumf %160, %161 : vector<1x128xf32>
    %163 = arith.addf %155, %159 : vector<1x128xf32>
    %164 = arith.addf %163, %162 : vector<1x128xf32>
    %165 = tpu.reciprocal %164 : vector<1x128xf32> -> vector<1x128xf32>
    %166 = arith.mulf %155, %165 : vector<1x128xf32>
    %167 = arith.mulf %159, %165 : vector<1x128xf32>
    %168 = arith.mulf %162, %165 : vector<1x128xf32>
    %c8_i32_61 = arith.constant 8 : i32
    %169 = arith.muli %arg0, %c8_i32_61 : i32
    %170 = arith.addi %169, %c4_i32 : i32
    %c0_i32_62 = arith.constant 0 : i32
    %171 = arith.cmpi eq, %170, %c0_i32_62 : i32
    %172 = arith.select %171, %137, %166 : vector<1x128xf32>
    %173 = arith.select %171, %138, %167 : vector<1x128xf32>
    %174 = arith.select %171, %139, %168 : vector<1x128xf32>
    %175 = vector.shape_cast %172 : vector<1x128xf32> to vector<1x1x128xf32>
    %176 = arith.index_cast %c4_i32 : i32 to index
    %c0_63 = arith.constant 0 : index
    %c0_64 = arith.constant 0 : index
    %177 = vector.load %arg5[%176, %c0_63, %c0_64] : memref<8x3x128xf32, #tpu.memory_space<vmem>>, vector<1x1x128xf32>
    tpu.vector_store %arg5[%176, %c0_63, %c0_64], %175 {strides = array<i32>} : memref<8x3x128xf32, #tpu.memory_space<vmem>>, vector<1x1x128xf32>,
    %178 = vector.shape_cast %173 : vector<1x128xf32> to vector<1x1x128xf32>
    %179 = arith.index_cast %c4_i32 : i32 to index
    %c1_65 = arith.constant 1 : index
    %c0_66 = arith.constant 0 : index
    %180 = vector.load %arg5[%179, %c1_65, %c0_66] : memref<8x3x128xf32, #tpu.memory_space<vmem>>, vector<1x1x128xf32>
    tpu.vector_store %arg5[%179, %c1_65, %c0_66], %178 {strides = array<i32>} : memref<8x3x128xf32, #tpu.memory_space<vmem>>, vector<1x1x128xf32>,
    %181 = vector.shape_cast %174 : vector<1x128xf32> to vector<1x1x128xf32>
    %182 = arith.index_cast %c4_i32 : i32 to index
    %c2_67 = arith.constant 2 : index
    %c0_68 = arith.constant 0 : index
    %183 = vector.load %arg5[%182, %c2_67, %c0_68] : memref<8x3x128xf32, #tpu.memory_space<vmem>>, vector<1x1x128xf32>
    tpu.vector_store %arg5[%182, %c2_67, %c0_68], %181 {strides = array<i32>} : memref<8x3x128xf32, #tpu.memory_space<vmem>>, vector<1x1x128xf32>,
    %c5_i32 = arith.constant 5 : i32
    %cst_69 = arith.constant dense<0.000000e+00> : vector<1x128xf32>
    %184 = tpu.matmul %173, %5, %cst_69 {dimension_numbers = #tpu.dot_dimension_numbers<[1], [0], [0], [1], [0, 0, 1, 1], [], []>} : vector<1x128xf32>, vector<128x128xf32>, vector<1x128xf32> -> vector<1x128xf32>
    %185 = arith.mulf %172, %184 : vector<1x128xf32>
    %186 = arith.mulf %3, %185 : vector<1x128xf32>
    %187 = arith.mulf %4, %173 : vector<1x128xf32>
    %188 = arith.subf %172, %186 : vector<1x128xf32>
    %cst_70 = arith.constant 0.000000e+00 : f32
    %189 = vector.broadcast %cst_70 : f32 to vector<1x128xf32>
    %190 = arith.maximumf %188, %189 : vector<1x128xf32>
    %191 = arith.addf %173, %186 : vector<1x128xf32>
    %192 = arith.subf %191, %187 : vector<1x128xf32>
    %cst_71 = arith.constant 0.000000e+00 : f32
    %193 = vector.broadcast %cst_71 : f32 to vector<1x128xf32>
    %194 = arith.maximumf %192, %193 : vector<1x128xf32>
    %195 = arith.addf %174, %187 : vector<1x128xf32>
    %cst_72 = arith.constant 0.000000e+00 : f32
    %196 = vector.broadcast %cst_72 : f32 to vector<1x128xf32>
    %197 = arith.maximumf %195, %196 : vector<1x128xf32>
    %198 = arith.addf %190, %194 : vector<1x128xf32>
    %199 = arith.addf %198, %197 : vector<1x128xf32>
    %200 = tpu.reciprocal %199 : vector<1x128xf32> -> vector<1x128xf32>
    %201 = arith.mulf %190, %200 : vector<1x128xf32>
    %202 = arith.mulf %194, %200 : vector<1x128xf32>
    %203 = arith.mulf %197, %200 : vector<1x128xf32>
    %c8_i32_73 = arith.constant 8 : i32
    %204 = arith.muli %arg0, %c8_i32_73 : i32
    %205 = arith.addi %204, %c5_i32 : i32
    %c0_i32_74 = arith.constant 0 : i32
    %206 = arith.cmpi eq, %205, %c0_i32_74 : i32
    %207 = arith.select %206, %172, %201 : vector<1x128xf32>
    %208 = arith.select %206, %173, %202 : vector<1x128xf32>
    %209 = arith.select %206, %174, %203 : vector<1x128xf32>
    %210 = vector.shape_cast %207 : vector<1x128xf32> to vector<1x1x128xf32>
    %211 = arith.index_cast %c5_i32 : i32 to index
    %c0_75 = arith.constant 0 : index
    %c0_76 = arith.constant 0 : index
    %212 = vector.load %arg5[%211, %c0_75, %c0_76] : memref<8x3x128xf32, #tpu.memory_space<vmem>>, vector<1x1x128xf32>
    tpu.vector_store %arg5[%211, %c0_75, %c0_76], %210 {strides = array<i32>} : memref<8x3x128xf32, #tpu.memory_space<vmem>>, vector<1x1x128xf32>,
    %213 = vector.shape_cast %208 : vector<1x128xf32> to vector<1x1x128xf32>
    %214 = arith.index_cast %c5_i32 : i32 to index
    %c1_77 = arith.constant 1 : index
    %c0_78 = arith.constant 0 : index
    %215 = vector.load %arg5[%214, %c1_77, %c0_78] : memref<8x3x128xf32, #tpu.memory_space<vmem>>, vector<1x1x128xf32>
    tpu.vector_store %arg5[%214, %c1_77, %c0_78], %213 {strides = array<i32>} : memref<8x3x128xf32, #tpu.memory_space<vmem>>, vector<1x1x128xf32>,
    %216 = vector.shape_cast %209 : vector<1x128xf32> to vector<1x1x128xf32>
    %217 = arith.index_cast %c5_i32 : i32 to index
    %c2_79 = arith.constant 2 : index
    %c0_80 = arith.constant 0 : index
    %218 = vector.load %arg5[%217, %c2_79, %c0_80] : memref<8x3x128xf32, #tpu.memory_space<vmem>>, vector<1x1x128xf32>
    tpu.vector_store %arg5[%217, %c2_79, %c0_80], %216 {strides = array<i32>} : memref<8x3x128xf32, #tpu.memory_space<vmem>>, vector<1x1x128xf32>,
    %c6_i32 = arith.constant 6 : i32
    %cst_81 = arith.constant dense<0.000000e+00> : vector<1x128xf32>
    %219 = tpu.matmul %208, %5, %cst_81 {dimension_numbers = #tpu.dot_dimension_numbers<[1], [0], [0], [1], [0, 0, 1, 1], [], []>} : vector<1x128xf32>, vector<128x128xf32>, vector<1x128xf32> -> vector<1x128xf32>
    %220 = arith.mulf %207, %219 : vector<1x128xf32>
    %221 = arith.mulf %3, %220 : vector<1x128xf32>
    %222 = arith.mulf %4, %208 : vector<1x128xf32>
    %223 = arith.subf %207, %221 : vector<1x128xf32>
    %cst_82 = arith.constant 0.000000e+00 : f32
    %224 = vector.broadcast %cst_82 : f32 to vector<1x128xf32>
    %225 = arith.maximumf %223, %224 : vector<1x128xf32>
    %226 = arith.addf %208, %221 : vector<1x128xf32>
    %227 = arith.subf %226, %222 : vector<1x128xf32>
    %cst_83 = arith.constant 0.000000e+00 : f32
    %228 = vector.broadcast %cst_83 : f32 to vector<1x128xf32>
    %229 = arith.maximumf %227, %228 : vector<1x128xf32>
    %230 = arith.addf %209, %222 : vector<1x128xf32>
    %cst_84 = arith.constant 0.000000e+00 : f32
    %231 = vector.broadcast %cst_84 : f32 to vector<1x128xf32>
    %232 = arith.maximumf %230, %231 : vector<1x128xf32>
    %233 = arith.addf %225, %229 : vector<1x128xf32>
    %234 = arith.addf %233, %232 : vector<1x128xf32>
    %235 = tpu.reciprocal %234 : vector<1x128xf32> -> vector<1x128xf32>
    %236 = arith.mulf %225, %235 : vector<1x128xf32>
    %237 = arith.mulf %229, %235 : vector<1x128xf32>
    %238 = arith.mulf %232, %235 : vector<1x128xf32>
    %c8_i32_85 = arith.constant 8 : i32
    %239 = arith.muli %arg0, %c8_i32_85 : i32
    %240 = arith.addi %239, %c6_i32 : i32
    %c0_i32_86 = arith.constant 0 : i32
    %241 = arith.cmpi eq, %240, %c0_i32_86 : i32
    %242 = arith.select %241, %207, %236 : vector<1x128xf32>
    %243 = arith.select %241, %208, %237 : vector<1x128xf32>
    %244 = arith.select %241, %209, %238 : vector<1x128xf32>
    %245 = vector.shape_cast %242 : vector<1x128xf32> to vector<1x1x128xf32>
    %246 = arith.index_cast %c6_i32 : i32 to index
    %c0_87 = arith.constant 0 : index
    %c0_88 = arith.constant 0 : index
    %247 = vector.load %arg5[%246, %c0_87, %c0_88] : memref<8x3x128xf32, #tpu.memory_space<vmem>>, vector<1x1x128xf32>
    tpu.vector_store %arg5[%246, %c0_87, %c0_88], %245 {strides = array<i32>} : memref<8x3x128xf32, #tpu.memory_space<vmem>>, vector<1x1x128xf32>,
    %248 = vector.shape_cast %243 : vector<1x128xf32> to vector<1x1x128xf32>
    %249 = arith.index_cast %c6_i32 : i32 to index
    %c1_89 = arith.constant 1 : index
    %c0_90 = arith.constant 0 : index
    %250 = vector.load %arg5[%249, %c1_89, %c0_90] : memref<8x3x128xf32, #tpu.memory_space<vmem>>, vector<1x1x128xf32>
    tpu.vector_store %arg5[%249, %c1_89, %c0_90], %248 {strides = array<i32>} : memref<8x3x128xf32, #tpu.memory_space<vmem>>, vector<1x1x128xf32>,
    %251 = vector.shape_cast %244 : vector<1x128xf32> to vector<1x1x128xf32>
    %252 = arith.index_cast %c6_i32 : i32 to index
    %c2_91 = arith.constant 2 : index
    %c0_92 = arith.constant 0 : index
    %253 = vector.load %arg5[%252, %c2_91, %c0_92] : memref<8x3x128xf32, #tpu.memory_space<vmem>>, vector<1x1x128xf32>
    tpu.vector_store %arg5[%252, %c2_91, %c0_92], %251 {strides = array<i32>} : memref<8x3x128xf32, #tpu.memory_space<vmem>>, vector<1x1x128xf32>,
    %c7_i32 = arith.constant 7 : i32
    %cst_93 = arith.constant dense<0.000000e+00> : vector<1x128xf32>
    %254 = tpu.matmul %243, %5, %cst_93 {dimension_numbers = #tpu.dot_dimension_numbers<[1], [0], [0], [1], [0, 0, 1, 1], [], []>} : vector<1x128xf32>, vector<128x128xf32>, vector<1x128xf32> -> vector<1x128xf32>
    %255 = arith.mulf %242, %254 : vector<1x128xf32>
    %256 = arith.mulf %3, %255 : vector<1x128xf32>
    %257 = arith.mulf %4, %243 : vector<1x128xf32>
    %258 = arith.subf %242, %256 : vector<1x128xf32>
    %cst_94 = arith.constant 0.000000e+00 : f32
    %259 = vector.broadcast %cst_94 : f32 to vector<1x128xf32>
    %260 = arith.maximumf %258, %259 : vector<1x128xf32>
    %261 = arith.addf %243, %256 : vector<1x128xf32>
    %262 = arith.subf %261, %257 : vector<1x128xf32>
    %cst_95 = arith.constant 0.000000e+00 : f32
    %263 = vector.broadcast %cst_95 : f32 to vector<1x128xf32>
    %264 = arith.maximumf %262, %263 : vector<1x128xf32>
    %265 = arith.addf %244, %257 : vector<1x128xf32>
    %cst_96 = arith.constant 0.000000e+00 : f32
    %266 = vector.broadcast %cst_96 : f32 to vector<1x128xf32>
    %267 = arith.maximumf %265, %266 : vector<1x128xf32>
    %268 = arith.addf %260, %264 : vector<1x128xf32>
    %269 = arith.addf %268, %267 : vector<1x128xf32>
    %270 = tpu.reciprocal %269 : vector<1x128xf32> -> vector<1x128xf32>
    %271 = arith.mulf %260, %270 : vector<1x128xf32>
    %272 = arith.mulf %264, %270 : vector<1x128xf32>
    %273 = arith.mulf %267, %270 : vector<1x128xf32>
    %c8_i32_97 = arith.constant 8 : i32
    %274 = arith.muli %arg0, %c8_i32_97 : i32
    %275 = arith.addi %274, %c7_i32 : i32
    %c0_i32_98 = arith.constant 0 : i32
    %276 = arith.cmpi eq, %275, %c0_i32_98 : i32
    %277 = arith.select %276, %242, %271 : vector<1x128xf32>
    %278 = arith.select %276, %243, %272 : vector<1x128xf32>
    %279 = arith.select %276, %244, %273 : vector<1x128xf32>
    %280 = vector.shape_cast %277 : vector<1x128xf32> to vector<1x1x128xf32>
    %281 = arith.index_cast %c7_i32 : i32 to index
    %c0_99 = arith.constant 0 : index
    %c0_100 = arith.constant 0 : index
    %282 = vector.load %arg5[%281, %c0_99, %c0_100] : memref<8x3x128xf32, #tpu.memory_space<vmem>>, vector<1x1x128xf32>
    tpu.vector_store %arg5[%281, %c0_99, %c0_100], %280 {strides = array<i32>} : memref<8x3x128xf32, #tpu.memory_space<vmem>>, vector<1x1x128xf32>,
    %283 = vector.shape_cast %278 : vector<1x128xf32> to vector<1x1x128xf32>
    %284 = arith.index_cast %c7_i32 : i32 to index
    %c1_101 = arith.constant 1 : index
    %c0_102 = arith.constant 0 : index
    %285 = vector.load %arg5[%284, %c1_101, %c0_102] : memref<8x3x128xf32, #tpu.memory_space<vmem>>, vector<1x1x128xf32>
    tpu.vector_store %arg5[%284, %c1_101, %c0_102], %283 {strides = array<i32>} : memref<8x3x128xf32, #tpu.memory_space<vmem>>, vector<1x1x128xf32>,
    %286 = vector.shape_cast %279 : vector<1x128xf32> to vector<1x1x128xf32>
    %287 = arith.index_cast %c7_i32 : i32 to index
    %c2_103 = arith.constant 2 : index
    %c0_104 = arith.constant 0 : index
    %288 = vector.load %arg5[%287, %c2_103, %c0_104] : memref<8x3x128xf32, #tpu.memory_space<vmem>>, vector<1x1x128xf32>
    tpu.vector_store %arg5[%287, %c2_103, %c0_104], %286 {strides = array<i32>} : memref<8x3x128xf32, #tpu.memory_space<vmem>>, vector<1x1x128xf32>,
    %c8_i32_105 = arith.constant 8 : i32
    %c0_106 = arith.constant 0 : index
    %c0_107 = arith.constant 0 : index
    %289 = vector.load %arg6[%c0_106, %c0_107] : memref<3x128xf32, #tpu.memory_space<vmem>>, vector<1x128xf32>
    tpu.vector_store %arg6[%c0_106, %c0_107], %277 {strides = array<i32>} : memref<3x128xf32, #tpu.memory_space<vmem>>, vector<1x128xf32>,
    %c1_108 = arith.constant 1 : index
    %c0_109 = arith.constant 0 : index
    %290 = vector.load %arg6[%c1_108, %c0_109] : memref<3x128xf32, #tpu.memory_space<vmem>>, vector<1x128xf32>
    tpu.vector_store %arg6[%c1_108, %c0_109], %278 {strides = array<i32>} : memref<3x128xf32, #tpu.memory_space<vmem>>, vector<1x128xf32>,
    %c2_110 = arith.constant 2 : index
    %c0_111 = arith.constant 0 : index
    %291 = vector.load %arg6[%c2_110, %c0_111] : memref<3x128xf32, #tpu.memory_space<vmem>>, vector<1x128xf32>
    tpu.vector_store %arg6[%c2_110, %c0_111], %279 {strides = array<i32>} : memref<3x128xf32, #tpu.memory_space<vmem>>, vector<1x128xf32>,
    return
  }
  func.func @transform_0(%arg0: i32) -> (i32, i32) {
    %c0_i32 = arith.constant 0 : i32
    %c0_i32_0 = arith.constant 0 : i32
    %c0_i32_1 = arith.constant 0 : i32
    return %c0_i32, %c0_i32_0 : i32, i32
  }
  func.func @transform_1(%arg0: i32) -> (i32, i32) {
    %c0_i32 = arith.constant 0 : i32
    %c0_i32_0 = arith.constant 0 : i32
    %c0_i32_1 = arith.constant 0 : i32
    return %c0_i32, %c0_i32_0 : i32, i32
  }
  func.func @transform_2(%arg0: i32) -> (i32, i32) {
    %c0_i32 = arith.constant 0 : i32
    %c0_i32_0 = arith.constant 0 : i32
    %c0_i32_1 = arith.constant 0 : i32
    return %c0_i32, %c0_i32_0 : i32, i32
  }
  func.func @transform_3(%arg0: i32) -> (i32, i32) {
    %c0_i32 = arith.constant 0 : i32
    %c0_i32_0 = arith.constant 0 : i32
    %c0_i32_1 = arith.constant 0 : i32
    return %c0_i32, %c0_i32_0 : i32, i32
  }
  func.func @transform_4(%arg0: i32) -> (i32, i32, i32) {
    %c0_i32 = arith.constant 0 : i32
    %c0_i32_0 = arith.constant 0 : i32
    %c0_i32_1 = arith.constant 0 : i32
    return %arg0, %c0_i32, %c0_i32_0 : i32, i32, i32
  }
}

</mosaic_0001>

<llo_original>
// kernel: tpu_custom_call.1
$region0: #{tpu_custom_call.1}
  #allocation0 [shape = 'u32[]', space=smem, size = 0x4, offset = 0x4, fixed_abs, tag = 'smem constant byte address 0x4 - core index']
  #allocation1 [shape = 'u32[144,128]{1,0:T(1,128)}', space=vmem, size = 0x12000, scoped, tag = 'internal scratch']
  #allocation2 [shape = 'f32[3,128]{1,0:T(4,128)}', space=vmem, size = 0x800, scoped, tag = 'scratch operand']
  %s0 = inlined_call_operand.hbm [shape: f32[3,128], index: 0, kind: input, shape index: {}]
  %s1 = inlined_call_operand.hbm [shape: f32[128,128], index: 1, kind: input, shape index: {}]
  %s2 = inlined_call_operand.vmem [shape: f32[1,128], index: 2, kind: input, shape index: {}]
  %s3 = inlined_call_operand.vmem [shape: f32[1,128], index: 3, kind: input, shape index: {}]
  %s4 = inlined_call_operand.vmem [shape: f32[8,3,128], index: 4, kind: output, shape index: {}]
  %s5 = sld [smem:[#allocation0]]
  $region38: #{tpu_custom_call.1} parent=0
    _
  %s7 = ssub.s32 1, %s5
  %s8 = scalar_select 0, %s7, %s5
  $region1: #{tpu_custom_call.1} parent=0
    #allocation3 [shape = 'u8[2048]{0}', space=vmem, size = 0x800, scoped, tag = 'input window, operand 0, single buffered']
    #allocation4 [shape = 's32[1]{0}', space=sflag, size = 0x4, scoped, tag = 'scoped memory for tpu_custom_call.1']
    #allocation5 [shape = 'u8[65536]{0}', space=vmem, size = 0x10000, scoped, tag = 'input window, operand 1, single buffered']
    #allocation6 [shape = 's32[1]{0}', space=sflag, size = 0x4, scoped, tag = 'scoped memory for tpu_custom_call.1']
    %9 = vsyncpa [#allocation4], 0
    %10 = vsyncpa [#allocation6], 0
    // Predicated region
    $region2: #{tpu_custom_call.1} parent=1 // pred_check
      _
    $region3: #{tpu_custom_call.1} parent=1 // pred_check_branch
      %12 = sbr.rel (0) target = $region5
    $region4: #{tpu_custom_call.1} parent=1 // pred_region
      %s14 = ssub.s32 64, 64
      %15 = vsyncadd [#allocation4], %s14
      %s17 = sshll.u32 [#allocation3], 4
      %s18 = int_to_ptr.vmem [resolvable:$true] %s17
      %20 = dma.hbm_to_vmem [thread:$0]  %s0, 64, %s18, [#allocation4]
    $region5: #{tpu_custom_call.1} parent=1 // pred_fallthru
      _
    // Predicated region
    $region6: #{tpu_custom_call.1} parent=1 // pred_check
      _
    $region7: #{tpu_custom_call.1} parent=1 // pred_check_branch
      %22 = sbr.rel (0) target = $region9
    $region8: #{tpu_custom_call.1} parent=1 // pred_region
      %s24 = ssub.s32 2048, 2048
      %25 = vsyncadd [#allocation6], %s24
      %s26 = sshll.u32 [#allocation5], 4
      %s27 = int_to_ptr.vmem [resolvable:$true] %s26
      %32 = dma.hbm_to_vmem [thread:$0]  %s1, 2048, %s27, [#allocation6], 128, 128, 8
    $region9: #{tpu_custom_call.1} parent=1 // pred_fallthru
      _
    // Predicated region
    $region10: #{tpu_custom_call.1} parent=1 // pred_check
      _
    $region11: #{tpu_custom_call.1} parent=1 // pred_check_branch
      %34 = sbr.rel (0) target = $region13
    $region12: #{tpu_custom_call.1} parent=1 // pred_region
      _
    $region13: #{tpu_custom_call.1} parent=1 // pred_fallthru
      _
    // Predicated region
    $region14: #{tpu_custom_call.1} parent=1 // pred_check
      _
    $region15: #{tpu_custom_call.1} parent=1 // pred_check_branch
      %36 = sbr.rel (0) target = $region17
    $region16: #{tpu_custom_call.1} parent=1 // pred_region
      _
    $region17: #{tpu_custom_call.1} parent=1 // pred_fallthru
      _
    // Predicated region
    $region18: #{tpu_custom_call.1} parent=1 // pred_check
      _
    $region19: #{tpu_custom_call.1} parent=1 // pred_check_branch
      %38 = sbr.rel (0) target = $region21
    $region20: #{tpu_custom_call.1} parent=1 // pred_region
      %39 = dma.done [#allocation4], 64
    $region21: #{tpu_custom_call.1} parent=1 // pred_fallthru
      _
    // Predicated region
    $region22: #{tpu_custom_call.1} parent=1 // pred_check
      _
    $region23: #{tpu_custom_call.1} parent=1 // pred_check_branch
      %41 = sbr.rel (0) target = $region25
    $region24: #{tpu_custom_call.1} parent=1 // pred_region
      %42 = dma.done [#allocation6], 2048
    $region25: #{tpu_custom_call.1} parent=1 // pred_fallthru
      _
    %p43 = scmp.eq.s32.totalorder 0, 0
    // Predicated region
    $region26: #{tpu_custom_call.1} parent=1 // pred_check
      %p44 = pneg %p43
    $region27: #{tpu_custom_call.1} parent=1 // pred_check_branch
      %46 = sbr.rel (%p44) target = $region29
    $region28: #{tpu_custom_call.1} parent=1 // pred_region
      %v47 = vld [vmem:[#allocation3] sm:$0x7]
      %48 = vst [vmem:[#allocation2] sm:$0x7] %v47
    $region29: #{tpu_custom_call.1} parent=1 // pred_fallthru
      _
    %v49 = vld [vmem:[%s2] sm:$0x1]
    %v50 = vld [vmem:[%s3] sm:$0x1]
    %v51 = vld [vmem:[#allocation5] sm:$0xff]
    %v52 = vld [vmem:[#allocation5 + $0x8] sm:$0xff]
    %v53 = vld [vmem:[#allocation5 + $0x10] sm:$0xff]
    %v54 = vld [vmem:[#allocation5 + $0x18] sm:$0xff]
    %v55 = vld [vmem:[#allocation5 + $0x20] sm:$0xff]
    %v56 = vld [vmem:[#allocation5 + $0x28] sm:$0xff]
    %v57 = vld [vmem:[#allocation5 + $0x30] sm:$0xff]
    %v58 = vld [vmem:[#allocation5 + $0x38] sm:$0xff]
    %v59 = vld [vmem:[#allocation5 + $0x40] sm:$0xff]
    %v60 = vld [vmem:[#allocation5 + $0x48] sm:$0xff]
    %v61 = vld [vmem:[#allocation5 + $0x50] sm:$0xff]
    %v62 = vld [vmem:[#allocation5 + $0x58] sm:$0xff]
    %v63 = vld [vmem:[#allocation5 + $0x60] sm:$0xff]
    %v64 = vld [vmem:[#allocation5 + $0x68] sm:$0xff]
    %v65 = vld [vmem:[#allocation5 + $0x70] sm:$0xff]
    %v66 = vld [vmem:[#allocation5 + $0x78] sm:$0xff]
    %v67 = vld [vmem:[#allocation2] sm:$0x1]
    %v68 = vld [vmem:[#allocation2 + $0x1] sm:$0x1]
    %v69 = vld [vmem:[#allocation2 + $0x2] sm:$0x1]
    %70 = vmatprep.subr.mxu0 0.0
    %71 = vmatpush1.msra.mxu0 %v51
    %72 = vmatprep.subr.mxu0 0.0
    %73 = vmatpush1.msra.mxu0 %v52
    %74 = vmatprep.subr.mxu0 0.0
    %75 = vmatpush1.msra.mxu0 %v53
    %76 = vmatprep.subr.mxu0 0.0
    %77 = vmatpush1.msra.mxu0 %v54
    %78 = vmatprep.subr.mxu0 0.0
    %79 = vmatpush1.msra.mxu0 %v55
    %80 = vmatprep.subr.mxu0 0.0
    %81 = vmatpush1.msra.mxu0 %v56
    %82 = vmatprep.subr.mxu0 0.0
    %83 = vmatpush1.msra.mxu0 %v57
    %84 = vmatprep.subr.mxu0 0.0
    %85 = vmatpush1.msra.mxu0 %v58
    %86 = vmatprep.subr.mxu0 0.0
    %87 = vmatpush1.msra.mxu0 %v59
    %88 = vmatprep.subr.mxu0 0.0
    %89 = vmatpush1.msra.mxu0 %v60
    %90 = vmatprep.subr.mxu0 0.0
    %91 = vmatpush1.msra.mxu0 %v61
    %92 = vmatprep.subr.mxu0 0.0
    %93 = vmatpush1.msra.mxu0 %v62
    %94 = vmatprep.subr.mxu0 0.0
    %95 = vmatpush1.msra.mxu0 %v63
    %96 = vmatprep.subr.mxu0 0.0
    %97 = vmatpush1.msra.mxu0 %v64
    %98 = vmatprep.subr.mxu0 0.0
    %99 = vmatpush1.msra.mxu0 %v65
    %100 = vmatprep.subr.mxu0 0.0
    %101 = vmatpush1.msra.mxu0 %v66
    %102 = vmatprep.subr.mxu0 0.0
    %103 = vmatpush1.msra.mxu0 0.0
    %104 = vmatprep.subr.mxu0 0.0
    %105 = vmatpush1.msra.mxu0 0.0
    %106 = vmatprep.subr.mxu0 0.0
    %107 = vmatpush1.msra.mxu0 0.0
    %108 = vmatprep.subr.mxu0 0.0
    %109 = vmatpush1.msra.mxu0 0.0
    %110 = vmatprep.subr.mxu0 0.0
    %111 = vmatpush1.msra.mxu0 0.0
    %112 = vmatprep.subr.mxu0 0.0
    %113 = vmatpush1.msra.mxu0 0.0
    %114 = vmatprep.subr.mxu0 0.0
    %115 = vmatpush1.msra.mxu0 0.0
    %116 = vmatprep.subr.mxu0 0.0
    %117 = vmatpush1.msra.mxu0 0.0
    %118 = vmatprep.subr.mxu0 0.0
    %119 = vmatpush1.msra.mxu0 0.0
    %120 = vmatprep.subr.mxu0 0.0
    %121 = vmatpush1.msra.mxu0 0.0
    %122 = vmatprep.subr.mxu0 0.0
    %123 = vmatpush1.msra.mxu0 0.0
    %124 = vmatprep.subr.mxu0 0.0
    %125 = vmatpush1.msra.mxu0 0.0
    %126 = vmatprep.subr.mxu0 0.0
    %127 = vmatpush1.msra.mxu0 0.0
    %128 = vmatprep.subr.mxu0 0.0
    %129 = vmatpush1.msra.mxu0 0.0
    %130 = vmatprep.subr.mxu0 0.0
    %131 = vmatpush1.msra.mxu0 0.0
    %132 = vmatprep.subr.mxu0 0.0
    %133 = vmatpush1.msra.mxu0 0.0
    %134 = vmatprep.mubr.f32.mxu0 0.0
    %135 = vmatmul.mubr.f32.gmra.mrb[0].mxu0 %v68
    %v136 = vpop.f32.mrb[0].mxu0
    %v137 = vadd.f32 0.0, %v136
    %v138 = vpop.f32.mrb[0].mxu0
    %139 = vdwg.mxu0
    %v140 = vmul.f32 %v67, %v137
    %v141 = vmul.f32 %v49, %v140
    %v142 = vmul.f32 %v50, %v68
    %v143 = vsub.f32 %v67, %v141
    %v144 = vmax.f32 %v143, 0.0
    %v145 = vadd.f32 %v68, %v141
    %v146 = vsub.f32 %v145, %v142
    %v147 = vmax.f32 %v146, 0.0
    %v148 = vadd.f32 %v69, %v142
    %v149 = vmax.f32 %v148, 0.0
    %v150 = vadd.f32 %v144, %v147
    %v151 = vadd.f32 %v150, %v149
    %v152 = vrcp.pop %v151
    %v153 = vmul.f32 %v144, %v152
    %v154 = vmul.f32 %v147, %v152
    %v155 = vmul.f32 %v149, %v152
    %s156 = smul.u32 0, 8
    %p157 = scmp.eq.s32.totalorder %s156, 0
    %s158 = scalar_select %p157, 1, 0
    %v159 = vstv %s158
    %vm160 = vcmp.eq.s32.totalorder %v159, 1
    %v161 = vsel %vm160, %v67, %v153
    %v162 = vsel %vm160, %v68, %v154
    %v163 = vsel %vm160, %v69, %v155
    %164 = vst [vmem:[%s4] sm:$0x1] %v161
    %165 = vst [vmem:[%s4 + $0x1] sm:$0x1] %v162
    %166 = vst [vmem:[%s4 + $0x2] sm:$0x1] %v163
    %167 = vmatprep.subr.mxu0 0.0
    %168 = vmatpush1.msra.mxu0 %v51
    %169 = vmatprep.subr.mxu0 0.0
    %170 = vmatpush1.msra.mxu0 %v52
    %171 = vmatprep.subr.mxu0 0.0
    %172 = vmatpush1.msra.mxu0 %v53
    %173 = vmatprep.subr.mxu0 0.0
    %174 = vmatpush1.msra.mxu0 %v54
    %175 = vmatprep.subr.mxu0 0.0
    %176 = vmatpush1.msra.mxu0 %v55
    %177 = vmatprep.subr.mxu0 0.0
    %178 = vmatpush1.msra.mxu0 %v56
    %179 = vmatprep.subr.mxu0 0.0
    %180 = vmatpush1.msra.mxu0 %v57
    %181 = vmatprep.subr.mxu0 0.0
    %182 = vmatpush1.msra.mxu0 %v58
    %183 = vmatprep.subr.mxu0 0.0
    %184 = vmatpush1.msra.mxu0 %v59
    %185 = vmatprep.subr.mxu0 0.0
    %186 = vmatpush1.msra.mxu0 %v60
    %187 = vmatprep.subr.mxu0 0.0
    %188 = vmatpush1.msra.mxu0 %v61
    %189 = vmatprep.subr.mxu0 0.0
    %190 = vmatpush1.msra.mxu0 %v62
    %191 = vmatprep.subr.mxu0 0.0
    %192 = vmatpush1.msra.mxu0 %v63
    %193 = vmatprep.subr.mxu0 0.0
    %194 = vmatpush1.msra.mxu0 %v64
    %195 = vmatprep.subr.mxu0 0.0
    %196 = vmatpush1.msra.mxu0 %v65
    %197 = vmatprep.subr.mxu0 0.0
    %198 = vmatpush1.msra.mxu0 %v66
    %199 = vmatprep.subr.mxu0 0.0
    %200 = vmatpush1.msra.mxu0 0.0
    %201 = vmatprep.subr.mxu0 0.0
    %202 = vmatpush1.msra.mxu0 0.0
    %203 = vmatprep.subr.mxu0 0.0
    %204 = vmatpush1.msra.mxu0 0.0
    %205 = vmatprep.subr.mxu0 0.0
    %206 = vmatpush1.msra.mxu0 0.0
    %207 = vmatprep.subr.mxu0 0.0
    %208 = vmatpush1.msra.mxu0 0.0
    %209 = vmatprep.subr.mxu0 0.0
    %210 = vmatpush1.msra.mxu0 0.0
    %211 = vmatprep.subr.mxu0 0.0
    %212 = vmatpush1.msra.mxu0 0.0
    %213 = vmatprep.subr.mxu0 0.0
    %214 = vmatpush1.msra.mxu0 0.0
    %215 = vmatprep.subr.mxu0 0.0
    %216 = vmatpush1.msra.mxu0 0.0
    %217 = vmatprep.subr.mxu0 0.0
    %218 = vmatpush1.msra.mxu0 0.0
    %219 = vmatprep.subr.mxu0 0.0
    %220 = vmatpush1.msra.mxu0 0.0
    %221 = vmatprep.subr.mxu0 0.0
    %222 = vmatpush1.msra.mxu0 0.0
    %223 = vmatprep.subr.mxu0 0.0
    %224 = vmatpush1.msra.mxu0 0.0
    %225 = vmatprep.subr.mxu0 0.0
    %226 = vmatpush1.msra.mxu0 0.0
    %227 = vmatprep.subr.mxu0 0.0
    %228 = vmatpush1.msra.mxu0 0.0
    %229 = vmatprep.subr.mxu0 0.0
    %230 = vmatpush1.msra.mxu0 0.0
    %231 = vmatprep.mubr.f32.mxu0 0.0
    %232 = vmatmul.mubr.f32.gmra.mrb[0].mxu0 %v162
    %v233 = vpop.f32.mrb[0].mxu0
    %v234 = vadd.f32 0.0, %v233
    %v235 = vpop.f32.mrb[0].mxu0
    %236 = vdwg.mxu0
    %v237 = vmul.f32 %v161, %v234
    %v238 = vmul.f32 %v49, %v237
    %v239 = vmul.f32 %v50, %v162
    %v240 = vsub.f32 %v161, %v238
    %v241 = vmax.f32 %v240, 0.0
    %v242 = vadd.f32 %v162, %v238
    %v243 = vsub.f32 %v242, %v239
    %v244 = vmax.f32 %v243, 0.0
    %v245 = vadd.f32 %v163, %v239
    %v246 = vmax.f32 %v245, 0.0
    %v247 = vadd.f32 %v241, %v244
    %v248 = vadd.f32 %v247, %v246
    %v249 = vrcp.pop %v248
    %v250 = vmul.f32 %v241, %v249
    %v251 = vmul.f32 %v244, %v249
    %v252 = vmul.f32 %v246, %v249
    %s253 = sadd.s32 %s156, 1
    %p254 = scmp.eq.s32.totalorder %s253, 0
    %s255 = scalar_select %p254, 1, 0
    %v256 = vstv %s255
    %vm257 = vcmp.eq.s32.totalorder %v256, 1
    %v258 = vsel %vm257, %v161, %v250
    %v259 = vsel %vm257, %v162, %v251
    %v260 = vsel %vm257, %v163, %v252
    %s261 = scalar_lea.vmem %s4, 4
    %262 = vst [vmem:[%s261] sm:$0x1] %v258
    %263 = vst [vmem:[%s261 + $0x1] sm:$0x1] %v259
    %264 = vst [vmem:[%s261 + $0x2] sm:$0x1] %v260
    %265 = vmatprep.subr.mxu0 0.0
    %266 = vmatpush1.msra.mxu0 %v51
    %267 = vmatprep.subr.mxu0 0.0
    %268 = vmatpush1.msra.mxu0 %v52
    %269 = vmatprep.subr.mxu0 0.0
    %270 = vmatpush1.msra.mxu0 %v53
    %271 = vmatprep.subr.mxu0 0.0
    %272 = vmatpush1.msra.mxu0 %v54
    %273 = vmatprep.subr.mxu0 0.0
    %274 = vmatpush1.msra.mxu0 %v55
    %275 = vmatprep.subr.mxu0 0.0
    %276 = vmatpush1.msra.mxu0 %v56
    %277 = vmatprep.subr.mxu0 0.0
    %278 = vmatpush1.msra.mxu0 %v57
    %279 = vmatprep.subr.mxu0 0.0
    %280 = vmatpush1.msra.mxu0 %v58
    %281 = vmatprep.subr.mxu0 0.0
    %282 = vmatpush1.msra.mxu0 %v59
    %283 = vmatprep.subr.mxu0 0.0
    %284 = vmatpush1.msra.mxu0 %v60
    %285 = vmatprep.subr.mxu0 0.0
    %286 = vmatpush1.msra.mxu0 %v61
    %287 = vmatprep.subr.mxu0 0.0
    %288 = vmatpush1.msra.mxu0 %v62
    %289 = vmatprep.subr.mxu0 0.0
    %290 = vmatpush1.msra.mxu0 %v63
    %291 = vmatprep.subr.mxu0 0.0
    %292 = vmatpush1.msra.mxu0 %v64
    %293 = vmatprep.subr.mxu0 0.0
    %294 = vmatpush1.msra.mxu0 %v65
    %295 = vmatprep.subr.mxu0 0.0
    %296 = vmatpush1.msra.mxu0 %v66
    %297 = vmatprep.subr.mxu0 0.0
    %298 = vmatpush1.msra.mxu0 0.0
    %299 = vmatprep.subr.mxu0 0.0
    %300 = vmatpush1.msra.mxu0 0.0
    %301 = vmatprep.subr.mxu0 0.0
    %302 = vmatpush1.msra.mxu0 0.0
    %303 = vmatprep.subr.mxu0 0.0
    %304 = vmatpush1.msra.mxu0 0.0
    %305 = vmatprep.subr.mxu0 0.0
    %306 = vmatpush1.msra.mxu0 0.0
    %307 = vmatprep.subr.mxu0 0.0
    %308 = vmatpush1.msra.mxu0 0.0
    %309 = vmatprep.subr.mxu0 0.0
    %310 = vmatpush1.msra.mxu0 0.0
    %311 = vmatprep.subr.mxu0 0.0
    %312 = vmatpush1.msra.mxu0 0.0
    %313 = vmatprep.subr.mxu0 0.0
    %314 = vmatpush1.msra.mxu0 0.0
    %315 = vmatprep.subr.mxu0 0.0
    %316 = vmatpush1.msra.mxu0 0.0
    %317 = vmatprep.subr.mxu0 0.0
    %318 = vmatpush1.msra.mxu0 0.0
    %319 = vmatprep.subr.mxu0 0.0
    %320 = vmatpush1.msra.mxu0 0.0
    %321 = vmatprep.subr.mxu0 0.0
    %322 = vmatpush1.msra.mxu0 0.0
    %323 = vmatprep.subr.mxu0 0.0
    %324 = vmatpush1.msra.mxu0 0.0
    %325 = vmatprep.subr.mxu0 0.0
    %326 = vmatpush1.msra.mxu0 0.0
    %327 = vmatprep.subr.mxu0 0.0
    %328 = vmatpush1.msra.mxu0 0.0
    %329 = vmatprep.mubr.f32.mxu0 0.0
    %330 = vmatmul.mubr.f32.gmra.mrb[0].mxu0 %v259
    %v331 = vpop.f32.mrb[0].mxu0
    %v332 = vadd.f32 0.0, %v331
    %v333 = vpop.f32.mrb[0].mxu0
    %334 = vdwg.mxu0
    %v335 = vmul.f32 %v258, %v332
    %v336 = vmul.f32 %v49, %v335
    %v337 = vmul.f32 %v50, %v259
    %v338 = vsub.f32 %v258, %v336
    %v339 = vmax.f32 %v338, 0.0
    %v340 = vadd.f32 %v259, %v336
    %v341 = vsub.f32 %v340, %v337
    %v342 = vmax.f32 %v341, 0.0
    %v343 = vadd.f32 %v260, %v337
    %v344 = vmax.f32 %v343, 0.0
    %v345 = vadd.f32 %v339, %v342
    %v346 = vadd.f32 %v345, %v344
    %v347 = vrcp.pop %v346
    %v348 = vmul.f32 %v339, %v347
    %v349 = vmul.f32 %v342, %v347
    %v350 = vmul.f32 %v344, %v347
    %s351 = sadd.s32 %s156, 2
    %p352 = scmp.eq.s32.totalorder %s351, 0
    %s353 = scalar_select %p352, 1, 0
    %v354 = vstv %s353
    %vm355 = vcmp.eq.s32.totalorder %v354, 1
    %v356 = vsel %vm355, %v258, %v348
    %v357 = vsel %vm355, %v259, %v349
    %v358 = vsel %vm355, %v260, %v350
    %s359 = scalar_lea.vmem %s4, 8
    %360 = vst [vmem:[%s359] sm:$0x1] %v356
    %361 = vst [vmem:[%s359 + $0x1] sm:$0x1] %v357
    %362 = vst [vmem:[%s359 + $0x2] sm:$0x1] %v358
    %363 = vmatprep.subr.mxu0 0.0
    %364 = vmatpush1.msra.mxu0 %v51
    %365 = vmatprep.subr.mxu0 0.0
    %366 = vmatpush1.msra.mxu0 %v52
    %367 = vmatprep.subr.mxu0 0.0
    %368 = vmatpush1.msra.mxu0 %v53
    %369 = vmatprep.subr.mxu0 0.0
    %370 = vmatpush1.msra.mxu0 %v54
    %371 = vmatprep.subr.mxu0 0.0
    %372 = vmatpush1.msra.mxu0 %v55
    %373 = vmatprep.subr.mxu0 0.0
    %374 = vmatpush1.msra.mxu0 %v56
    %375 = vmatprep.subr.mxu0 0.0
    %376 = vmatpush1.msra.mxu0 %v57
    %377 = vmatprep.subr.mxu0 0.0
    %378 = vmatpush1.msra.mxu0 %v58
    %379 = vmatprep.subr.mxu0 0.0
    %380 = vmatpush1.msra.mxu0 %v59
    %381 = vmatprep.subr.mxu0 0.0
    %382 = vmatpush1.msra.mxu0 %v60
    %383 = vmatprep.subr.mxu0 0.0
    %384 = vmatpush1.msra.mxu0 %v61
    %385 = vmatprep.subr.mxu0 0.0
    %386 = vmatpush1.msra.mxu0 %v62
    %387 = vmatprep.subr.mxu0 0.0
    %388 = vmatpush1.msra.mxu0 %v63
    %389 = vmatprep.subr.mxu0 0.0
    %390 = vmatpush1.msra.mxu0 %v64
    %391 = vmatprep.subr.mxu0 0.0
    %392 = vmatpush1.msra.mxu0 %v65
    %393 = vmatprep.subr.mxu0 0.0
    %394 = vmatpush1.msra.mxu0 %v66
    %395 = vmatprep.subr.mxu0 0.0
    %396 = vmatpush1.msra.mxu0 0.0
    %397 = vmatprep.subr.mxu0 0.0
    %398 = vmatpush1.msra.mxu0 0.0
    %399 = vmatprep.subr.mxu0 0.0
    %400 = vmatpush1.msra.mxu0 0.0
    %401 = vmatprep.subr.mxu0 0.0
    %402 = vmatpush1.msra.mxu0 0.0
    %403 = vmatprep.subr.mxu0 0.0
    %404 = vmatpush1.msra.mxu0 0.0
    %405 = vmatprep.subr.mxu0 0.0
    %406 = vmatpush1.msra.mxu0 0.0
    %407 = vmatprep.subr.mxu0 0.0
    %408 = vmatpush1.msra.mxu0 0.0
    %409 = vmatprep.subr.mxu0 0.0
    %410 = vmatpush1.msra.mxu0 0.0
    %411 = vmatprep.subr.mxu0 0.0
    %412 = vmatpush1.msra.mxu0 0.0
    %413 = vmatprep.subr.mxu0 0.0
    %414 = vmatpush1.msra.mxu0 0.0
    %415 = vmatprep.subr.mxu0 0.0
    %416 = vmatpush1.msra.mxu0 0.0
    %417 = vmatprep.subr.mxu0 0.0
    %418 = vmatpush1.msra.mxu0 0.0
    %419 = vmatprep.subr.mxu0 0.0
    %420 = vmatpush1.msra.mxu0 0.0
    %421 = vmatprep.subr.mxu0 0.0
    %422 = vmatpush1.msra.mxu0 0.0
    %423 = vmatprep.subr.mxu0 0.0
    %424 = vmatpush1.msra.mxu0 0.0
    %425 = vmatprep.subr.mxu0 0.0
    %426 = vmatpush1.msra.mxu0 0.0
    %427 = vmatprep.mubr.f32.mxu0 0.0
    %428 = vmatmul.mubr.f32.gmra.mrb[0].mxu0 %v357
    %v429 = vpop.f32.mrb[0].mxu0
    %v430 = vadd.f32 0.0, %v429
    %v431 = vpop.f32.mrb[0].mxu0
    %432 = vdwg.mxu0
    %v433 = vmul.f32 %v356, %v430
    %v434 = vmul.f32 %v49, %v433
    %v435 = vmul.f32 %v50, %v357
    %v436 = vsub.f32 %v356, %v434
    %v437 = vmax.f32 %v436, 0.0
    %v438 = vadd.f32 %v357, %v434
    %v439 = vsub.f32 %v438, %v435
    %v440 = vmax.f32 %v439, 0.0
    %v441 = vadd.f32 %v358, %v435
    %v442 = vmax.f32 %v441, 0.0
    %v443 = vadd.f32 %v437, %v440
    %v444 = vadd.f32 %v443, %v442
    %v445 = vrcp.pop %v444
    %v446 = vmul.f32 %v437, %v445
    %v447 = vmul.f32 %v440, %v445
    %v448 = vmul.f32 %v442, %v445
    %s449 = sadd.s32 %s156, 3
    %p450 = scmp.eq.s32.totalorder %s449, 0
    %s451 = scalar_select %p450, 1, 0
    %v452 = vstv %s451
    %vm453 = vcmp.eq.s32.totalorder %v452, 1
    %v454 = vsel %vm453, %v356, %v446
    %v455 = vsel %vm453, %v357, %v447
    %v456 = vsel %vm453, %v358, %v448
    %s457 = scalar_lea.vmem %s4, 12
    %458 = vst [vmem:[%s457] sm:$0x1] %v454
    %459 = vst [vmem:[%s457 + $0x1] sm:$0x1] %v455
    %460 = vst [vmem:[%s457 + $0x2] sm:$0x1] %v456
    %461 = vmatprep.subr.mxu0 0.0
    %462 = vmatpush1.msra.mxu0 %v51
    %463 = vmatprep.subr.mxu0 0.0
    %464 = vmatpush1.msra.mxu0 %v52
    %465 = vmatprep.subr.mxu0 0.0
    %466 = vmatpush1.msra.mxu0 %v53
    %467 = vmatprep.subr.mxu0 0.0
    %468 = vmatpush1.msra.mxu0 %v54
    %469 = vmatprep.subr.mxu0 0.0
    %470 = vmatpush1.msra.mxu0 %v55
    %471 = vmatprep.subr.mxu0 0.0
    %472 = vmatpush1.msra.mxu0 %v56
    %473 = vmatprep.subr.mxu0 0.0
    %474 = vmatpush1.msra.mxu0 %v57
    %475 = vmatprep.subr.mxu0 0.0
    %476 = vmatpush1.msra.mxu0 %v58
    %477 = vmatprep.subr.mxu0 0.0
    %478 = vmatpush1.msra.mxu0 %v59
    %479 = vmatprep.subr.mxu0 0.0
    %480 = vmatpush1.msra.mxu0 %v60
    %481 = vmatprep.subr.mxu0 0.0
    %482 = vmatpush1.msra.mxu0 %v61
    %483 = vmatprep.subr.mxu0 0.0
    %484 = vmatpush1.msra.mxu0 %v62
    %485 = vmatprep.subr.mxu0 0.0
    %486 = vmatpush1.msra.mxu0 %v63
    %487 = vmatprep.subr.mxu0 0.0
    %488 = vmatpush1.msra.mxu0 %v64
    %489 = vmatprep.subr.mxu0 0.0
    %490 = vmatpush1.msra.mxu0 %v65
    %491 = vmatprep.subr.mxu0 0.0
    %492 = vmatpush1.msra.mxu0 %v66
    %493 = vmatprep.subr.mxu0 0.0
    %494 = vmatpush1.msra.mxu0 0.0
    %495 = vmatprep.subr.mxu0 0.0
    %496 = vmatpush1.msra.mxu0 0.0
    %497 = vmatprep.subr.mxu0 0.0
    %498 = vmatpush1.msra.mxu0 0.0
    %499 = vmatprep.subr.mxu0 0.0
    %500 = vmatpush1.msra.mxu0 0.0
    %501 = vmatprep.subr.mxu0 0.0
    %502 = vmatpush1.msra.mxu0 0.0
    %503 = vmatprep.subr.mxu0 0.0
    %504 = vmatpush1.msra.mxu0 0.0
    %505 = vmatprep.subr.mxu0 0.0
    %506 = vmatpush1.msra.mxu0 0.0
    %507 = vmatprep.subr.mxu0 0.0
    %508 = vmatpush1.msra.mxu0 0.0
    %509 = vmatprep.subr.mxu0 0.0
    %510 = vmatpush1.msra.mxu0 0.0
    %511 = vmatprep.subr.mxu0 0.0
    %512 = vmatpush1.msra.mxu0 0.0
    %513 = vmatprep.subr.mxu0 0.0
    %514 = vmatpush1.msra.mxu0 0.0
    %515 = vmatprep.subr.mxu0 0.0
    %516 = vmatpush1.msra.mxu0 0.0
    %517 = vmatprep.subr.mxu0 0.0
    %518 = vmatpush1.msra.mxu0 0.0
    %519 = vmatprep.subr.mxu0 0.0
    %520 = vmatpush1.msra.mxu0 0.0
    %521 = vmatprep.subr.mxu0 0.0
    %522 = vmatpush1.msra.mxu0 0.0
    %523 = vmatprep.subr.mxu0 0.0
    %524 = vmatpush1.msra.mxu0 0.0
    %525 = vmatprep.mubr.f32.mxu0 0.0
    %526 = vmatmul.mubr.f32.gmra.mrb[0].mxu0 %v455
    %v527 = vpop.f32.mrb[0].mxu0
    %v528 = vadd.f32 0.0, %v527
    %v529 = vpop.f32.mrb[0].mxu0
    %530 = vdwg.mxu0
    %v531 = vmul.f32 %v454, %v528
    %v532 = vmul.f32 %v49, %v531
    %v533 = vmul.f32 %v50, %v455
    %v534 = vsub.f32 %v454, %v532
    %v535 = vmax.f32 %v534, 0.0
    %v536 = vadd.f32 %v455, %v532
    %v537 = vsub.f32 %v536, %v533
    %v538 = vmax.f32 %v537, 0.0
    %v539 = vadd.f32 %v456, %v533
    %v540 = vmax.f32 %v539, 0.0
    %v541 = vadd.f32 %v535, %v538
    %v542 = vadd.f32 %v541, %v540
    %v543 = vrcp.pop %v542
    %v544 = vmul.f32 %v535, %v543
    %v545 = vmul.f32 %v538, %v543
    %v546 = vmul.f32 %v540, %v543
    %s547 = sadd.s32 %s156, 4
    %p548 = scmp.eq.s32.totalorder %s547, 0
    %s549 = scalar_select %p548, 1, 0
    %v550 = vstv %s549
    %vm551 = vcmp.eq.s32.totalorder %v550, 1
    %v552 = vsel %vm551, %v454, %v544
    %v553 = vsel %vm551, %v455, %v545
    %v554 = vsel %vm551, %v456, %v546
    %s555 = scalar_lea.vmem %s4, 16
    %556 = vst [vmem:[%s555] sm:$0x1] %v552
    %557 = vst [vmem:[%s555 + $0x1] sm:$0x1] %v553
    %558 = vst [vmem:[%s555 + $0x2] sm:$0x1] %v554
    %559 = vmatprep.subr.mxu0 0.0
    %560 = vmatpush1.msra.mxu0 %v51
    %561 = vmatprep.subr.mxu0 0.0
    %562 = vmatpush1.msra.mxu0 %v52
    %563 = vmatprep.subr.mxu0 0.0
    %564 = vmatpush1.msra.mxu0 %v53
    %565 = vmatprep.subr.mxu0 0.0
    %566 = vmatpush1.msra.mxu0 %v54
    %567 = vmatprep.subr.mxu0 0.0
    %568 = vmatpush1.msra.mxu0 %v55
    %569 = vmatprep.subr.mxu0 0.0
    %570 = vmatpush1.msra.mxu0 %v56
    %571 = vmatprep.subr.mxu0 0.0
    %572 = vmatpush1.msra.mxu0 %v57
    %573 = vmatprep.subr.mxu0 0.0
    %574 = vmatpush1.msra.mxu0 %v58
    %575 = vmatprep.subr.mxu0 0.0
    %576 = vmatpush1.msra.mxu0 %v59
    %577 = vmatprep.subr.mxu0 0.0
    %578 = vmatpush1.msra.mxu0 %v60
    %579 = vmatprep.subr.mxu0 0.0
    %580 = vmatpush1.msra.mxu0 %v61
    %581 = vmatprep.subr.mxu0 0.0
    %582 = vmatpush1.msra.mxu0 %v62
    %583 = vmatprep.subr.mxu0 0.0
    %584 = vmatpush1.msra.mxu0 %v63
    %585 = vmatprep.subr.mxu0 0.0
    %586 = vmatpush1.msra.mxu0 %v64
    %587 = vmatprep.subr.mxu0 0.0
    %588 = vmatpush1.msra.mxu0 %v65
    %589 = vmatprep.subr.mxu0 0.0
    %590 = vmatpush1.msra.mxu0 %v66
    %591 = vmatprep.subr.mxu0 0.0
    %592 = vmatpush1.msra.mxu0 0.0
    %593 = vmatprep.subr.mxu0 0.0
    %594 = vmatpush1.msra.mxu0 0.0
    %595 = vmatprep.subr.mxu0 0.0
    %596 = vmatpush1.msra.mxu0 0.0
    %597 = vmatprep.subr.mxu0 0.0
    %598 = vmatpush1.msra.mxu0 0.0
    %599 = vmatprep.subr.mxu0 0.0
    %600 = vmatpush1.msra.mxu0 0.0
    %601 = vmatprep.subr.mxu0 0.0
    %602 = vmatpush1.msra.mxu0 0.0
    %603 = vmatprep.subr.mxu0 0.0
    %604 = vmatpush1.msra.mxu0 0.0
    %605 = vmatprep.subr.mxu0 0.0
    %606 = vmatpush1.msra.mxu0 0.0
    %607 = vmatprep.subr.mxu0 0.0
    %608 = vmatpush1.msra.mxu0 0.0
    %609 = vmatprep.subr.mxu0 0.0
    %610 = vmatpush1.msra.mxu0 0.0
    %611 = vmatprep.subr.mxu0 0.0
    %612 = vmatpush1.msra.mxu0 0.0
    %613 = vmatprep.subr.mxu0 0.0
    %614 = vmatpush1.msra.mxu0 0.0
    %615 = vmatprep.subr.mxu0 0.0
    %616 = vmatpush1.msra.mxu0 0.0
    %617 = vmatprep.subr.mxu0 0.0
    %618 = vmatpush1.msra.mxu0 0.0
    %619 = vmatprep.subr.mxu0 0.0
    %620 = vmatpush1.msra.mxu0 0.0
    %621 = vmatprep.subr.mxu0 0.0
    %622 = vmatpush1.msra.mxu0 0.0
    %623 = vmatprep.mubr.f32.mxu0 0.0
    %624 = vmatmul.mubr.f32.gmra.mrb[0].mxu0 %v553
    %v625 = vpop.f32.mrb[0].mxu0
    %v626 = vadd.f32 0.0, %v625
    %v627 = vpop.f32.mrb[0].mxu0
    %628 = vdwg.mxu0
    %v629 = vmul.f32 %v552, %v626
    %v630 = vmul.f32 %v49, %v629
    %v631 = vmul.f32 %v50, %v553
    %v632 = vsub.f32 %v552, %v630
    %v633 = vmax.f32 %v632, 0.0
    %v634 = vadd.f32 %v553, %v630
    %v635 = vsub.f32 %v634, %v631
    %v636 = vmax.f32 %v635, 0.0
    %v637 = vadd.f32 %v554, %v631
    %v638 = vmax.f32 %v637, 0.0
    %v639 = vadd.f32 %v633, %v636
    %v640 = vadd.f32 %v639, %v638
    %v641 = vrcp.pop %v640
    %v642 = vmul.f32 %v633, %v641
    %v643 = vmul.f32 %v636, %v641
    %v644 = vmul.f32 %v638, %v641
    %s645 = sadd.s32 %s156, 5
    %p646 = scmp.eq.s32.totalorder %s645, 0
    %s647 = scalar_select %p646, 1, 0
    %v648 = vstv %s647
    %vm649 = vcmp.eq.s32.totalorder %v648, 1
    %v650 = vsel %vm649, %v552, %v642
    %v651 = vsel %vm649, %v553, %v643
    %v652 = vsel %vm649, %v554, %v644
    %s653 = scalar_lea.vmem %s4, 20
    %654 = vst [vmem:[%s653] sm:$0x1] %v650
    %655 = vst [vmem:[%s653 + $0x1] sm:$0x1] %v651
    %656 = vst [vmem:[%s653 + $0x2] sm:$0x1] %v652
    %657 = vmatprep.subr.mxu0 0.0
    %658 = vmatpush1.msra.mxu0 %v51
    %659 = vmatprep.subr.mxu0 0.0
    %660 = vmatpush1.msra.mxu0 %v52
    %661 = vmatprep.subr.mxu0 0.0
    %662 = vmatpush1.msra.mxu0 %v53
    %663 = vmatprep.subr.mxu0 0.0
    %664 = vmatpush1.msra.mxu0 %v54
    %665 = vmatprep.subr.mxu0 0.0
    %666 = vmatpush1.msra.mxu0 %v55
    %667 = vmatprep.subr.mxu0 0.0
    %668 = vmatpush1.msra.mxu0 %v56
    %669 = vmatprep.subr.mxu0 0.0
    %670 = vmatpush1.msra.mxu0 %v57
    %671 = vmatprep.subr.mxu0 0.0
    %672 = vmatpush1.msra.mxu0 %v58
    %673 = vmatprep.subr.mxu0 0.0
    %674 = vmatpush1.msra.mxu0 %v59
    %675 = vmatprep.subr.mxu0 0.0
    %676 = vmatpush1.msra.mxu0 %v60
    %677 = vmatprep.subr.mxu0 0.0
    %678 = vmatpush1.msra.mxu0 %v61
    %679 = vmatprep.subr.mxu0 0.0
    %680 = vmatpush1.msra.mxu0 %v62
    %681 = vmatprep.subr.mxu0 0.0
    %682 = vmatpush1.msra.mxu0 %v63
    %683 = vmatprep.subr.mxu0 0.0
    %684 = vmatpush1.msra.mxu0 %v64
    %685 = vmatprep.subr.mxu0 0.0
    %686 = vmatpush1.msra.mxu0 %v65
    %687 = vmatprep.subr.mxu0 0.0
    %688 = vmatpush1.msra.mxu0 %v66
    %689 = vmatprep.subr.mxu0 0.0
    %690 = vmatpush1.msra.mxu0 0.0
    %691 = vmatprep.subr.mxu0 0.0
    %692 = vmatpush1.msra.mxu0 0.0
    %693 = vmatprep.subr.mxu0 0.0
    %694 = vmatpush1.msra.mxu0 0.0
    %695 = vmatprep.subr.mxu0 0.0
    %696 = vmatpush1.msra.mxu0 0.0
    %697 = vmatprep.subr.mxu0 0.0
    %698 = vmatpush1.msra.mxu0 0.0
    %699 = vmatprep.subr.mxu0 0.0
    %700 = vmatpush1.msra.mxu0 0.0
    %701 = vmatprep.subr.mxu0 0.0
    %702 = vmatpush1.msra.mxu0 0.0
    %703 = vmatprep.subr.mxu0 0.0
    %704 = vmatpush1.msra.mxu0 0.0
    %705 = vmatprep.subr.mxu0 0.0
    %706 = vmatpush1.msra.mxu0 0.0
    %707 = vmatprep.subr.mxu0 0.0
    %708 = vmatpush1.msra.mxu0 0.0
    %709 = vmatprep.subr.mxu0 0.0
    %710 = vmatpush1.msra.mxu0 0.0
    %711 = vmatprep.subr.mxu0 0.0
    %712 = vmatpush1.msra.mxu0 0.0
    %713 = vmatprep.subr.mxu0 0.0
    %714 = vmatpush1.msra.mxu0 0.0
    %715 = vmatprep.subr.mxu0 0.0
    %716 = vmatpush1.msra.mxu0 0.0
    %717 = vmatprep.subr.mxu0 0.0
    %718 = vmatpush1.msra.mxu0 0.0
    %719 = vmatprep.subr.mxu0 0.0
    %720 = vmatpush1.msra.mxu0 0.0
    %721 = vmatprep.mubr.f32.mxu0 0.0
    %722 = vmatmul.mubr.f32.gmra.mrb[0].mxu0 %v651
    %v723 = vpop.f32.mrb[0].mxu0
    %v724 = vadd.f32 0.0, %v723
    %v725 = vpop.f32.mrb[0].mxu0
    %726 = vdwg.mxu0
    %v727 = vmul.f32 %v650, %v724
    %v728 = vmul.f32 %v49, %v727
    %v729 = vmul.f32 %v50, %v651
    %v730 = vsub.f32 %v650, %v728
    %v731 = vmax.f32 %v730, 0.0
    %v732 = vadd.f32 %v651, %v728
    %v733 = vsub.f32 %v732, %v729
    %v734 = vmax.f32 %v733, 0.0
    %v735 = vadd.f32 %v652, %v729
    %v736 = vmax.f32 %v735, 0.0
    %v737 = vadd.f32 %v731, %v734
    %v738 = vadd.f32 %v737, %v736
    %v739 = vrcp.pop %v738
    %v740 = vmul.f32 %v731, %v739
    %v741 = vmul.f32 %v734, %v739
    %v742 = vmul.f32 %v736, %v739
    %s743 = sadd.s32 %s156, 6
    %p744 = scmp.eq.s32.totalorder %s743, 0
    %s745 = scalar_select %p744, 1, 0
    %v746 = vstv %s745
    %vm747 = vcmp.eq.s32.totalorder %v746, 1
    %v748 = vsel %vm747, %v650, %v740
    %v749 = vsel %vm747, %v651, %v741
    %v750 = vsel %vm747, %v652, %v742
    %s751 = scalar_lea.vmem %s4, 24
    %752 = vst [vmem:[%s751] sm:$0x1] %v748
    %753 = vst [vmem:[%s751 + $0x1] sm:$0x1] %v749
    %754 = vst [vmem:[%s751 + $0x2] sm:$0x1] %v750
    %755 = vmatprep.subr.mxu0 0.0
    %756 = vmatpush1.msra.mxu0 %v51
    %757 = vmatprep.subr.mxu0 0.0
    %758 = vmatpush1.msra.mxu0 %v52
    %759 = vmatprep.subr.mxu0 0.0
    %760 = vmatpush1.msra.mxu0 %v53
    %761 = vmatprep.subr.mxu0 0.0
    %762 = vmatpush1.msra.mxu0 %v54
    %763 = vmatprep.subr.mxu0 0.0
    %764 = vmatpush1.msra.mxu0 %v55
    %765 = vmatprep.subr.mxu0 0.0
    %766 = vmatpush1.msra.mxu0 %v56
    %767 = vmatprep.subr.mxu0 0.0
    %768 = vmatpush1.msra.mxu0 %v57
    %769 = vmatprep.subr.mxu0 0.0
    %770 = vmatpush1.msra.mxu0 %v58
    %771 = vmatprep.subr.mxu0 0.0
    %772 = vmatpush1.msra.mxu0 %v59
    %773 = vmatprep.subr.mxu0 0.0
    %774 = vmatpush1.msra.mxu0 %v60
    %775 = vmatprep.subr.mxu0 0.0
    %776 = vmatpush1.msra.mxu0 %v61
    %777 = vmatprep.subr.mxu0 0.0
    %778 = vmatpush1.msra.mxu0 %v62
    %779 = vmatprep.subr.mxu0 0.0
    %780 = vmatpush1.msra.mxu0 %v63
    %781 = vmatprep.subr.mxu0 0.0
    %782 = vmatpush1.msra.mxu0 %v64
    %783 = vmatprep.subr.mxu0 0.0
    %784 = vmatpush1.msra.mxu0 %v65
    %785 = vmatprep.subr.mxu0 0.0
    %786 = vmatpush1.msra.mxu0 %v66
    %787 = vmatprep.subr.mxu0 0.0
    %788 = vmatpush1.msra.mxu0 0.0
    %789 = vmatprep.subr.mxu0 0.0
    %790 = vmatpush1.msra.mxu0 0.0
    %791 = vmatprep.subr.mxu0 0.0
    %792 = vmatpush1.msra.mxu0 0.0
    %793 = vmatprep.subr.mxu0 0.0
    %794 = vmatpush1.msra.mxu0 0.0
    %795 = vmatprep.subr.mxu0 0.0
    %796 = vmatpush1.msra.mxu0 0.0
    %797 = vmatprep.subr.mxu0 0.0
    %798 = vmatpush1.msra.mxu0 0.0
    %799 = vmatprep.subr.mxu0 0.0
    %800 = vmatpush1.msra.mxu0 0.0
    %801 = vmatprep.subr.mxu0 0.0
    %802 = vmatpush1.msra.mxu0 0.0
    %803 = vmatprep.subr.mxu0 0.0
    %804 = vmatpush1.msra.mxu0 0.0
    %805 = vmatprep.subr.mxu0 0.0
    %806 = vmatpush1.msra.mxu0 0.0
    %807 = vmatprep.subr.mxu0 0.0
    %808 = vmatpush1.msra.mxu0 0.0
    %809 = vmatprep.subr.mxu0 0.0
    %810 = vmatpush1.msra.mxu0 0.0
    %811 = vmatprep.subr.mxu0 0.0
    %812 = vmatpush1.msra.mxu0 0.0
    %813 = vmatprep.subr.mxu0 0.0
    %814 = vmatpush1.msra.mxu0 0.0
    %815 = vmatprep.subr.mxu0 0.0
    %816 = vmatpush1.msra.mxu0 0.0
    %817 = vmatprep.subr.mxu0 0.0
    %818 = vmatpush1.msra.mxu0 0.0
    %819 = vmatprep.mubr.f32.mxu0 0.0
    %820 = vmatmul.mubr.f32.gmra.mrb[0].mxu0 %v749
    %v821 = vpop.f32.mrb[0].mxu0
    %v822 = vadd.f32 0.0, %v821
    %v823 = vpop.f32.mrb[0].mxu0
    %824 = vdwg.mxu0
    %v825 = vmul.f32 %v748, %v822
    %v826 = vmul.f32 %v49, %v825
    %v827 = vmul.f32 %v50, %v749
    %v828 = vsub.f32 %v748, %v826
    %v829 = vmax.f32 %v828, 0.0
    %v830 = vadd.f32 %v749, %v826
    %v831 = vsub.f32 %v830, %v827
    %v832 = vmax.f32 %v831, 0.0
    %v833 = vadd.f32 %v750, %v827
    %v834 = vmax.f32 %v833, 0.0
    %v835 = vadd.f32 %v829, %v832
    %v836 = vadd.f32 %v835, %v834
    %v837 = vrcp.pop %v836
    %v838 = vmul.f32 %v829, %v837
    %v839 = vmul.f32 %v832, %v837
    %v840 = vmul.f32 %v834, %v837
    %s841 = sadd.s32 %s156, 7
    %p842 = scmp.eq.s32.totalorder %s841, 0
    %s843 = scalar_select %p842, 1, 0
    %v844 = vstv %s843
    %vm845 = vcmp.eq.s32.totalorder %v844, 1
    %v846 = vsel %vm845, %v748, %v838
    %v847 = vsel %vm845, %v749, %v839
    %v848 = vsel %vm845, %v750, %v840
    %s849 = scalar_lea.vmem %s4, 28
    %850 = vst [vmem:[%s849] sm:$0x1] %v846
    %851 = vst [vmem:[%s849 + $0x1] sm:$0x1] %v847
    %852 = vst [vmem:[%s849 + $0x2] sm:$0x1] %v848
    %853 = vst [vmem:[#allocation2] sm:$0x1] %v846
    %854 = vst [vmem:[#allocation2 + $0x1] sm:$0x1] %v847
    %855 = vst [vmem:[#allocation2 + $0x2] sm:$0x1] %v848
    // Predicated region
    $region30: #{tpu_custom_call.1} parent=1 // pred_check
      _
    $region31: #{tpu_custom_call.1} parent=1 // pred_check_branch
      %857 = sbr.rel (0) target = $region33
    $region32: #{tpu_custom_call.1} parent=1 // pred_region
      _
    $region33: #{tpu_custom_call.1} parent=1 // pred_fallthru
      _
    // Predicated region
    $region34: #{tpu_custom_call.1} parent=1 // pred_check
      _
    $region35: #{tpu_custom_call.1} parent=1 // pred_check_branch
      %859 = sbr.rel (0) target = $region37
    $region36: #{tpu_custom_call.1} parent=1 // pred_region
      _
    $region37: #{tpu_custom_call.1} parent=1 // pred_fallthru
      _
    %860 = vsyncpa [#allocation4], 1
    %861 = vsyncpa [#allocation6], 1

</llo_original>
